<compile_context>
chip_gen: v6e
topology: v6e:2x2x1
jax: 0.10.0
libtpu: 0.0.40
codegen_flags: <defaults>
</compile_context>

<pallas_src>
import functools
import math

import jax
import jax.numpy as jnp
from jax.experimental import pallas as pl
from jax.experimental.pallas import tpu as pltpu


# --------------------------------------------------------------------------- #
# Kernels
# --------------------------------------------------------------------------- #

def _ln_wide_kernel(x_ref, g_ref, b_ref, o_ref, *, eps, feat):
    """Row-streaming LayerNorm; features live on the lane axis (E >= 128 case)."""
    x = x_ref[...].astype(jnp.float32)                      # (tr, E), f32 math
    mean = jnp.mean(x, axis=-1, keepdims=True)              # XLU cross-lane reduce
    diff = x - mean
    var = jnp.sum(diff * diff, axis=-1, keepdims=True) * (1.0 / (feat - 1))
    inv = 1.0 / (jnp.sqrt(var) + eps)                       # EUP sqrt; eps on std
    g = g_ref[...].astype(jnp.float32)
    b = b_ref[...].astype(jnp.float32)
    o_ref[...] = (g * (diff * inv) + b).astype(o_ref.dtype)


def _ln_packed_kernel(x_ref, g_ref, b_ref, o_ref, *, eps, feat):
    """Lane-dense LayerNorm for feat < 128 with feat | 128.

    Each 128-lane vreg row holds k = 128 // feat original rows side by side.
    Per-row statistics are computed with an aligned-segment XOR-butterfly
    all-reduce along the lane axis (pltpu.roll on the XLU), so all loads/stores
    stay full-width unmasked 128-lane accesses.
    """
    x = x_ref[...].astype(jnp.float32)                      # (tr, 128)
    lanes = x.shape[-1]
    lane = jax.lax.broadcasted_iota(jnp.int32, x.shape, dimension=x.ndim - 1)

    # Per butterfly distance d, figure out which of the two rotations delivers
    # the value from lane (j ^ d). Selecting this way keeps the kernel agnostic
    # to the rotation-direction convention of pltpu.roll.
    select_first = []
    d = 1
    while d < feat:
        l_rot = pltpu.roll(lane, d, axis=1)
        select_first.append((d, l_rot == (lane ^ d)))
        d *= 2

    def seg_allsum(v):
        acc = v
        for dist, use_first in select_first:
            r_a = pltpu.roll(acc, dist, axis=1)
            r_b = pltpu.roll(acc, lanes - dist, axis=1)
            acc = acc + jnp.where(use_first, r_a, r_b)
        return acc

    mean = seg_allsum(x) * (1.0 / feat)                     # segment mean, broadcast per lane
    diff = x - mean
    var = seg_allsum(diff * diff) * (1.0 / (feat - 1))      # unbiased (torch Tensor.std)
    inv = 1.0 / (jnp.sqrt(var) + eps)
    g = g_ref[...].astype(jnp.float32)
    b = b_ref[...].astype(jnp.float32)
    o_ref[...] = (g * (diff * inv) + b).astype(o_ref.dtype)


# --------------------------------------------------------------------------- #
# Tiling / wrapper
# --------------------------------------------------------------------------- #

def _plan_row_tile(rows, lanes, itemsize):
    """Pick the row tile and VMEM limit from the chip's VMEM capacity."""
    sub = 8 * max(1, 4 // itemsize)          # sublane multiple: 8 f32, 16 bf16, 32 int8
    vmem_cap = 128 * 1024 * 1024
    try:                                     # per-generation budget (v7x has 64 MiB)
        vmem_cap = int(pltpu.get_tpu_info().vmem_capacity_bytes)
    except Exception:
        pass
    budget = min(vmem_cap // 4, 32 * 1024 * 1024)
    per_row = lanes * itemsize * 4           # 2 input + 2 output pipeline buffers
    tr = budget // max(per_row, 1)
    tr = max(sub, min(1024, (tr // sub) * sub))
    # Keep >= ~8 grid steps when the row count allows: amortizes the ~0.35us
    # per-step overhead and lets ("parallel",) shard rows across v7x's two TCs.
    cap = -(-rows // 8)
    cap = max(sub, ((cap + sub - 1) // sub) * sub)
    tr = min(tr, cap)
    if rows <= tr:
        tr = rows                            # single full-extent block is always legal
    buf_bytes = 4 * tr * lanes * itemsize + 4 * lanes * 4
    vmem_limit = int(min(vmem_cap * 9 // 10,
                         max(32 * 1024 * 1024, buf_bytes + (8 << 20))))
    return tr, vmem_limit


def layer_norm(x, gamma, beta, eps=1e-6):
    orig_shape = x.shape
    feat = orig_shape[-1]
    if feat < 2:
        raise ValueError("unbiased std (torch Tensor.std) is undefined for f_size < 2")
    rows = int(math.prod(orig_shape[:-1]))
    dtype = x.dtype
    itemsize = jnp.dtype(dtype).itemsize

    x2 = x.reshape(rows, feat)               # native dtype; NO wrapper-side f32 cast
    gamma = gamma.reshape(-1)
    beta = beta.reshape(-1)

    packed = (feat < 128) and (128 % feat == 0)
    if packed:
        k = 128 // feat
        rows_p = -(-rows // k)
        pad = rows_p * k - rows
        if pad:
            x2 = jnp.concatenate([x2, jnp.zeros((pad, feat), dtype)], axis=0)
        work = x2.reshape(rows_p, 128)        # row-major regroup: free, no HBM copy
        lanes = 128
        g2 = jnp.tile(gamma, k).reshape(1, lanes)
        b2 = jnp.tile(beta, k).reshape(1, lanes)
        work_rows = rows_p
        kernel = functools.partial(_ln_packed_kernel, eps=float(eps), feat=feat)
    else:
        work = x2
        lanes = feat
        g2 = gamma.reshape(1, lanes)
        b2 = beta.reshape(1, lanes)
        work_rows = rows
        kernel = functools.partial(_ln_wide_kernel, eps=float(eps), feat=feat)

    tr, vmem_limit = _plan_row_tile(work_rows, lanes, itemsize)
    grid = (pl.cdiv(work_rows, tr),)

    # Memory-bound: one read + one write of the activation slab (native dtype).
    cost = pl.CostEstimate(
        flops=int(12 * work_rows * lanes),
        transcendentals=int(2 * work_rows * max(1, lanes // feat)),
        bytes_accessed=int(2 * work_rows * lanes * itemsize + 2 * lanes * 4),
    )

    out = pl.pallas_call(
        kernel,
        out_shape=jax.ShapeDtypeStruct((work_rows, lanes), dtype),
        grid_spec=pltpu.PrefetchScalarGridSpec(
            num_scalar_prefetch=0,
            grid=grid,
            in_specs=[
                pl.BlockSpec((tr, lanes), lambda i: (i, 0)),   # activations (row-tiled)
                pl.BlockSpec((1, lanes), lambda i: (0, 0)),    # gamma (constant block)
                pl.BlockSpec((1, lanes), lambda i: (0, 0)),    # beta  (constant block)
            ],
            out_specs=pl.BlockSpec((tr, lanes), lambda i: (i, 0)),
        ),
        compiler_params=pltpu.CompilerParams(
            dimension_semantics=("parallel",),
            vmem_limit_bytes=vmem_limit,
        ),
        cost_estimate=cost,
    )(work, g2, b2)

    if packed:
        out = out.reshape(work_rows * (128 // feat), feat)[:rows]
    return out.reshape(orig_shape)


# --------------------------------------------------------------------------- #
# Self-test
# --------------------------------------------------------------------------- #

def _reference(x, gamma, beta, eps):
    x32 = x.astype(jnp.float32)
    mean = x32.mean(-1, keepdims=True)
    std = jnp.std(x32, axis=-1, keepdims=True, ddof=1)      # torch Tensor.std: unbiased
    return (gamma.astype(jnp.float32) * (x32 - mean) / (std + eps)
            + beta.astype(jnp.float32))


if __name__ == "__main__":
    eps = 1e-6
    key = jax.random.PRNGKey(0)
    k1, k2, k3, k4 = jax.random.split(key, 4)

    # 1) BERT-shaped case: (batch=2, seq=8, hidden=32), f32 -> lane-dense packed path.
    B, S, E = 2, 8, 32
    x = jax.random.normal(k1, (B, S, E), jnp.float32)
    gamma = 1.0 + 0.1 * jax.random.normal(k2, (E,), jnp.float32)
    beta = 0.1 * jax.random.normal(k3, (E,), jnp.float32)

    out = jax.block_until_ready(layer_norm(x, gamma, beta, eps=eps))
    ref = _reference(x, gamma, beta, eps)
    assert out.shape == x.shape and out.dtype == x.dtype
    err = float(jnp.max(jnp.abs(out.astype(jnp.float32) - ref)))
    assert err < 1e-4, f"packed path error {err}"

    # 2) Wide path with native bf16 I/O and a masked partial last block
    #    (rows=36 is not a multiple of the 16-row bf16 tile).
    B2, S2, E2 = 4, 9, 256
    xb = jax.random.normal(k4, (B2, S2, E2), jnp.float32).astype(jnp.bfloat16)
    gamma2 = jnp.ones((E2,), jnp.float32)
    beta2 = jnp.zeros((E2,), jnp.float32)

    out2 = jax.block_until_ready(layer_norm(xb, gamma2, beta2, eps=eps))
    ref2 = _reference(xb, gamma2, beta2, eps)
    assert out2.shape == xb.shape and out2.dtype == jnp.bfloat16
    err2 = float(jnp.max(jnp.abs(out2.astype(jnp.float32) - ref2)))
    assert err2 < 5e-2, f"wide path error {err2}"

    print("KERNEL_OK")
</pallas_src>

<mosaic_0001>
module attributes {stable_mosaic.version = 11 : i64} {
  func.func @_ln_packed_kernel(%arg0: i32, %arg1: memref<4x128xf32, #tpu.memory_space<vmem>>, %arg2: memref<1x128xf32, #tpu.memory_space<vmem>>, %arg3: memref<1x128xf32, #tpu.memory_space<vmem>>, %arg4: memref<4x128xf32, #tpu.memory_space<vmem>>) attributes {dimension_semantics = [#tpu.dimension_semantics<parallel>], iteration_bounds = array<i64: 1>, scalar_prefetch = 0 : i64, scratch_operands = 0 : i64, tpu.core_type = #tpu.core_type<tc>, window_params = [{transform_indices = @transform_0, window_bounds = array<i64: 4, 128>}, {pipeline_mode = #tpu.pipeline_mode<synchronous>, transform_indices = @transform_1, window_bounds = array<i64: 1, 128>}, {pipeline_mode = #tpu.pipeline_mode<synchronous>, transform_indices = @transform_2, window_bounds = array<i64: 1, 128>}, {transform_indices = @transform_3, window_bounds = array<i64: 4, 128>}]} {
    %c0 = arith.constant 0 : index
    %c0_0 = arith.constant 0 : index
    %0 = vector.load %arg1[%c0, %c0_0] : memref<4x128xf32, #tpu.memory_space<vmem>>, vector<4x128xf32>
    %1 = tpu.iota {dimensions = array<i32: 1>} : vector<4x128xi32>
    %c1_i32 = arith.constant 1 : i32
    %2 = tpu.dynamic_rotate %1 by %c1_i32 dim 1 : vector<4x128xi32>, i32 -> vector<4x128xi32>
    %c1_i32_1 = arith.constant 1 : i32
    %3 = vector.broadcast %c1_i32_1 : i32 to vector<4x128xi32>
    %4 = arith.xori %1, %3 : vector<4x128xi32>
    %5 = arith.cmpi eq, %2, %4 : vector<4x128xi32>
    %c2_i32 = arith.constant 2 : i32
    %6 = tpu.dynamic_rotate %1 by %c2_i32 dim 1 : vector<4x128xi32>, i32 -> vector<4x128xi32>
    %c2_i32_2 = arith.constant 2 : i32
    %7 = vector.broadcast %c2_i32_2 : i32 to vector<4x128xi32>
    %8 = arith.xori %1, %7 : vector<4x128xi32>
    %9 = arith.cmpi eq, %6, %8 : vector<4x128xi32>
    %c4_i32 = arith.constant 4 : i32
    %10 = tpu.dynamic_rotate %1 by %c4_i32 dim 1 : vector<4x128xi32>, i32 -> vector<4x128xi32>
    %c4_i32_3 = arith.constant 4 : i32
    %11 = vector.broadcast %c4_i32_3 : i32 to vector<4x128xi32>
    %12 = arith.xori %1, %11 : vector<4x128xi32>
    %13 = arith.cmpi eq, %10, %12 : vector<4x128xi32>
    %c8_i32 = arith.constant 8 : i32
    %14 = tpu.dynamic_rotate %1 by %c8_i32 dim 1 : vector<4x128xi32>, i32 -> vector<4x128xi32>
    %c8_i32_4 = arith.constant 8 : i32
    %15 = vector.broadcast %c8_i32_4 : i32 to vector<4x128xi32>
    %16 = arith.xori %1, %15 : vector<4x128xi32>
    %17 = arith.cmpi eq, %14, %16 : vector<4x128xi32>
    %c16_i32 = arith.constant 16 : i32
    %18 = tpu.dynamic_rotate %1 by %c16_i32 dim 1 : vector<4x128xi32>, i32 -> vector<4x128xi32>
    %c16_i32_5 = arith.constant 16 : i32
    %19 = vector.broadcast %c16_i32_5 : i32 to vector<4x128xi32>
    %20 = arith.xori %1, %19 : vector<4x128xi32>
    %21 = arith.cmpi eq, %18, %20 : vector<4x128xi32>
    %c1_i32_6 = arith.constant 1 : i32
    %22 = tpu.dynamic_rotate %0 by %c1_i32_6 dim 1 : vector<4x128xf32>, i32 -> vector<4x128xf32>
    %c127_i32 = arith.constant 127 : i32
    %23 = tpu.dynamic_rotate %0 by %c127_i32 dim 1 : vector<4x128xf32>, i32 -> vector<4x128xf32>
    %24 = arith.select %5, %22, %23 : vector<4x128xi1>, vector<4x128xf32>
    %25 = arith.addf %0, %24 : vector<4x128xf32>
    %c2_i32_7 = arith.constant 2 : i32
    %26 = tpu.dynamic_rotate %25 by %c2_i32_7 dim 1 : vector<4x128xf32>, i32 -> vector<4x128xf32>
    %c126_i32 = arith.constant 126 : i32
    %27 = tpu.dynamic_rotate %25 by %c126_i32 dim 1 : vector<4x128xf32>, i32 -> vector<4x128xf32>
    %28 = arith.select %9, %26, %27 : vector<4x128xi1>, vector<4x128xf32>
    %29 = arith.addf %25, %28 : vector<4x128xf32>
    %c4_i32_8 = arith.constant 4 : i32
    %30 = tpu.dynamic_rotate %29 by %c4_i32_8 dim 1 : vector<4x128xf32>, i32 -> vector<4x128xf32>
    %c124_i32 = arith.constant 124 : i32
    %31 = tpu.dynamic_rotate %29 by %c124_i32 dim 1 : vector<4x128xf32>, i32 -> vector<4x128xf32>
    %32 = arith.select %13, %30, %31 : vector<4x128xi1>, vector<4x128xf32>
    %33 = arith.addf %29, %32 : vector<4x128xf32>
    %c8_i32_9 = arith.constant 8 : i32
    %34 = tpu.dynamic_rotate %33 by %c8_i32_9 dim 1 : vector<4x128xf32>, i32 -> vector<4x128xf32>
    %c120_i32 = arith.constant 120 : i32
    %35 = tpu.dynamic_rotate %33 by %c120_i32 dim 1 : vector<4x128xf32>, i32 -> vector<4x128xf32>
    %36 = arith.select %17, %34, %35 : vector<4x128xi1>, vector<4x128xf32>
    %37 = arith.addf %33, %36 : vector<4x128xf32>
    %c16_i32_10 = arith.constant 16 : i32
    %38 = tpu.dynamic_rotate %37 by %c16_i32_10 dim 1 : vector<4x128xf32>, i32 -> vector<4x128xf32>
    %c112_i32 = arith.constant 112 : i32
    %39 = tpu.dynamic_rotate %37 by %c112_i32 dim 1 : vector<4x128xf32>, i32 -> vector<4x128xf32>
    %40 = arith.select %21, %38, %39 : vector<4x128xi1>, vector<4x128xf32>
    %41 = arith.addf %37, %40 : vector<4x128xf32>
    %cst = arith.constant 3.125000e-02 : f32
    %42 = vector.broadcast %cst : f32 to vector<4x128xf32>
    %43 = arith.mulf %41, %42 : vector<4x128xf32>
    %44 = arith.subf %0, %43 : vector<4x128xf32>
    %45 = arith.mulf %44, %44 : vector<4x128xf32>
    %c1_i32_11 = arith.constant 1 : i32
    %46 = tpu.dynamic_rotate %45 by %c1_i32_11 dim 1 : vector<4x128xf32>, i32 -> vector<4x128xf32>
    %c127_i32_12 = arith.constant 127 : i32
    %47 = tpu.dynamic_rotate %45 by %c127_i32_12 dim 1 : vector<4x128xf32>, i32 -> vector<4x128xf32>
    %48 = arith.select %5, %46, %47 : vector<4x128xi1>, vector<4x128xf32>
    %49 = arith.addf %45, %48 : vector<4x128xf32>
    %c2_i32_13 = arith.constant 2 : i32
    %50 = tpu.dynamic_rotate %49 by %c2_i32_13 dim 1 : vector<4x128xf32>, i32 -> vector<4x128xf32>
    %c126_i32_14 = arith.constant 126 : i32
    %51 = tpu.dynamic_rotate %49 by %c126_i32_14 dim 1 : vector<4x128xf32>, i32 -> vector<4x128xf32>
    %52 = arith.select %9, %50, %51 : vector<4x128xi1>, vector<4x128xf32>
    %53 = arith.addf %49, %52 : vector<4x128xf32>
    %c4_i32_15 = arith.constant 4 : i32
    %54 = tpu.dynamic_rotate %53 by %c4_i32_15 dim 1 : vector<4x128xf32>, i32 -> vector<4x128xf32>
    %c124_i32_16 = arith.constant 124 : i32
    %55 = tpu.dynamic_rotate %53 by %c124_i32_16 dim 1 : vector<4x128xf32>, i32 -> vector<4x128xf32>
    %56 = arith.select %13, %54, %55 : vector<4x128xi1>, vector<4x128xf32>
    %57 = arith.addf %53, %56 : vector<4x128xf32>
    %c8_i32_17 = arith.constant 8 : i32
    %58 = tpu.dynamic_rotate %57 by %c8_i32_17 dim 1 : vector<4x128xf32>, i32 -> vector<4x128xf32>
    %c120_i32_18 = arith.constant 120 : i32
    %59 = tpu.dynamic_rotate %57 by %c120_i32_18 dim 1 : vector<4x128xf32>, i32 -> vector<4x128xf32>
    %60 = arith.select %17, %58, %59 : vector<4x128xi1>, vector<4x128xf32>
    %61 = arith.addf %57, %60 : vector<4x128xf32>
    %c16_i32_19 = arith.constant 16 : i32
    %62 = tpu.dynamic_rotate %61 by %c16_i32_19 dim 1 : vector<4x128xf32>, i32 -> vector<4x128xf32>
    %c112_i32_20 = arith.constant 112 : i32
    %63 = tpu.dynamic_rotate %61 by %c112_i32_20 dim 1 : vector<4x128xf32>, i32 -> vector<4x128xf32>
    %64 = arith.select %21, %62, %63 : vector<4x128xi1>, vector<4x128xf32>
    %65 = arith.addf %61, %64 : vector<4x128xf32>
    %cst_21 = arith.constant 0.0322580636 : f32
    %66 = vector.broadcast %cst_21 : f32 to vector<4x128xf32>
    %67 = arith.mulf %65, %66 : vector<4x128xf32>
    %68 = math.sqrt %67 : vector<4x128xf32>
    %cst_22 = arith.constant 9.99999997E-7 : f32
    %69 = vector.broadcast %cst_22 : f32 to vector<4x128xf32>
    %70 = arith.addf %68, %69 : vector<4x128xf32>
    %cst_23 = arith.constant 1.000000e+00 : f32
    %71 = vector.broadcast %cst_23 : f32 to vector<4x128xf32>
    %72 = arith.divf %71, %70 : vector<4x128xf32>
    %c0_24 = arith.constant 0 : index
    %c0_25 = arith.constant 0 : index
    %73 = vector.load %arg2[%c0_24, %c0_25] : memref<1x128xf32, #tpu.memory_space<vmem>>, vector<1x128xf32>
    %c0_26 = arith.constant 0 : index
    %c0_27 = arith.constant 0 : index
    %74 = vector.load %arg3[%c0_26, %c0_27] : memref<1x128xf32, #tpu.memory_space<vmem>>, vector<1x128xf32>
    %75 = arith.mulf %44, %72 : vector<4x128xf32>
    %76 = vector.broadcast %73 : vector<1x128xf32> to vector<4x128xf32>
    %77 = arith.mulf %76, %75 : vector<4x128xf32>
    %78 = vector.broadcast %74 : vector<1x128xf32> to vector<4x128xf32>
    %79 = arith.addf %77, %78 : vector<4x128xf32>
    %c0_28 = arith.constant 0 : index
    %c0_29 = arith.constant 0 : index
    %80 = vector.load %arg4[%c0_28, %c0_29] : memref<4x128xf32, #tpu.memory_space<vmem>>, vector<4x128xf32>
    tpu.vector_store %arg4[%c0_28, %c0_29], %79 {strides = array<i32>} : memref<4x128xf32, #tpu.memory_space<vmem>>, vector<4x128xf32>,
    return
  }
  func.func @transform_0(%arg0: i32) -> (i32, i32) {
    %c0_i32 = arith.constant 0 : i32
    %c0_i32_0 = arith.constant 0 : i32
    return %arg0, %c0_i32 : i32, i32
  }
  func.func @transform_1(%arg0: i32) -> (i32, i32) {
    %c0_i32 = arith.constant 0 : i32
    %c0_i32_0 = arith.constant 0 : i32
    %c0_i32_1 = arith.constant 0 : i32
    return %c0_i32, %c0_i32_0 : i32, i32
  }
  func.func @transform_2(%arg0: i32) -> (i32, i32) {
    %c0_i32 = arith.constant 0 : i32
    %c0_i32_0 = arith.constant 0 : i32
    %c0_i32_1 = arith.constant 0 : i32
    return %c0_i32, %c0_i32_0 : i32, i32
  }
  func.func @transform_3(%arg0: i32) -> (i32, i32) {
    %c0_i32 = arith.constant 0 : i32
    %c0_i32_0 = arith.constant 0 : i32
    return %arg0, %c0_i32 : i32, i32
  }
}

</mosaic_0001>

<llo_original>
// kernel: tpu_custom_call.1
$region0: #{tpu_custom_call.1}
  #allocation0 [shape = 'u32[]', space=smem, size = 0x4, offset = 0x4, fixed_abs, tag = 'smem constant byte address 0x4 - core index']
  #allocation1 [shape = 'u32[144,128]{1,0:T(1,128)}', space=vmem, size = 0x12000, scoped, tag = 'internal scratch']
  %s0 = inlined_call_operand.hbm [shape: f32[4,128], index: 0, kind: input, shape index: {}]
  %s1 = inlined_call_operand.vmem [shape: f32[1,128], index: 1, kind: input, shape index: {}]
  %s2 = inlined_call_operand.vmem [shape: f32[1,128], index: 2, kind: input, shape index: {}]
  %s3 = inlined_call_operand.hbm [shape: f32[4,128], index: 3, kind: output, shape index: {}]
  %s4 = sld [smem:[#allocation0]]
  $region26: #{tpu_custom_call.1} parent=0
    _
  %s6 = ssub.s32 1, %s4
  %s7 = scalar_select 0, %s6, %s4
  $region1: #{tpu_custom_call.1} parent=0
    #allocation2 [shape = 'u8[2048]{0}', space=vmem, size = 0x800, scoped, tag = 'input window, operand 0, single buffered']
    #allocation3 [shape = 's32[1]{0}', space=sflag, size = 0x4, scoped, tag = 'scoped memory for tpu_custom_call.1']
    #allocation4 [shape = 's32[1]{0}', space=sflag, size = 0x4, scoped, tag = 'scoped memory for tpu_custom_call.1']
    #allocation5 [shape = 'u8[2048]{0}', space=vmem, size = 0x800, scoped, tag = 'output window, operand 0, single buffered']
    %8 = vsyncpa [#allocation3], 0
    %9 = vsyncpa [#allocation4], 0
    // Predicated region
    $region2: #{tpu_custom_call.1} parent=1 // pred_check
      _
    $region3: #{tpu_custom_call.1} parent=1 // pred_check_branch
      %11 = sbr.rel (0) target = $region5
    $region4: #{tpu_custom_call.1} parent=1 // pred_region
      %s13 = ssub.s32 64, 64
      %14 = vsyncadd [#allocation3], %s13
      %s16 = sshll.u32 [#allocation2], 4
      %s17 = int_to_ptr.vmem [resolvable:$true] %s16
      %19 = dma.hbm_to_vmem [thread:$0]  %s0, 64, %s17, [#allocation3]
    $region5: #{tpu_custom_call.1} parent=1 // pred_fallthru
      _
    // Predicated region
    $region6: #{tpu_custom_call.1} parent=1 // pred_check
      _
    $region7: #{tpu_custom_call.1} parent=1 // pred_check_branch
      %21 = sbr.rel (0) target = $region9
    $region8: #{tpu_custom_call.1} parent=1 // pred_region
      _
    $region9: #{tpu_custom_call.1} parent=1 // pred_fallthru
      _
    // Predicated region
    $region10: #{tpu_custom_call.1} parent=1 // pred_check
      _
    $region11: #{tpu_custom_call.1} parent=1 // pred_check_branch
      %23 = sbr.rel (0) target = $region13
    $region12: #{tpu_custom_call.1} parent=1 // pred_region
      _
    $region13: #{tpu_custom_call.1} parent=1 // pred_fallthru
      _
    // Predicated region
    $region14: #{tpu_custom_call.1} parent=1 // pred_check
      _
    $region15: #{tpu_custom_call.1} parent=1 // pred_check_branch
      %25 = sbr.rel (0) target = $region17
    $region16: #{tpu_custom_call.1} parent=1 // pred_region
      %26 = dma.done [#allocation3], 64
    $region17: #{tpu_custom_call.1} parent=1 // pred_fallthru
      _
    %v27 = vld [vmem:[#allocation2] sm:$0xf]
    %v28 = vlaneseq
    %v29 = vand.u32 %v28, 127
    %30 = vrot.lane.b32.xlu0 %v29, 1
    %v31 = vpop.permute.xlu0 %30
    %v32 = vxor.u32 %v29, 1
    %vm33 = vcmp.eq.s32.totalorder %v31, %v32
    %34 = vrot.lane.b32.xlu0 %v29, 2
    %v35 = vpop.permute.xlu0 %34
    %v36 = vxor.u32 %v29, 2
    %vm37 = vcmp.eq.s32.totalorder %v35, %v36
    %38 = vrot.lane.b32.xlu0 %v29, 4
    %v39 = vpop.permute.xlu0 %38
    %v40 = vxor.u32 %v29, 4
    %vm41 = vcmp.eq.s32.totalorder %v39, %v40
    %42 = vrot.lane.b32.xlu0 %v29, 8
    %v43 = vpop.permute.xlu0 %42
    %v44 = vxor.u32 %v29, 8
    %vm45 = vcmp.eq.s32.totalorder %v43, %v44
    %46 = vrot.lane.b32.xlu0 %v29, 16
    %v47 = vpop.permute.xlu0 %46
    %v48 = vxor.u32 %v29, 16
    %vm49 = vcmp.eq.s32.totalorder %v47, %v48
    %50 = vrot.lane.b32.xlu0 %v27, 1
    %v51 = vpop.permute.xlu0 %50
    %52 = vrot.lane.b32.xlu0 %v27, 127
    %v53 = vpop.permute.xlu0 %52
    %v54 = vsel %vm33, %v51, %v53
    %v55 = vadd.f32 %v27, %v54
    %56 = vrot.lane.b32.xlu0 %v55, 2
    %v57 = vpop.permute.xlu0 %56
    %58 = vrot.lane.b32.xlu0 %v55, 126
    %v59 = vpop.permute.xlu0 %58
    %v60 = vsel %vm37, %v57, %v59
    %v61 = vadd.f32 %v55, %v60
    %62 = vrot.lane.b32.xlu0 %v61, 4
    %v63 = vpop.permute.xlu0 %62
    %64 = vrot.lane.b32.xlu0 %v61, 124
    %v65 = vpop.permute.xlu0 %64
    %v66 = vsel %vm41, %v63, %v65
    %v67 = vadd.f32 %v61, %v66
    %68 = vrot.lane.b32.xlu0 %v67, 8
    %v69 = vpop.permute.xlu0 %68
    %70 = vrot.lane.b32.xlu0 %v67, 120
    %v71 = vpop.permute.xlu0 %70
    %v72 = vsel %vm45, %v69, %v71
    %v73 = vadd.f32 %v67, %v72
    %74 = vrot.lane.b32.xlu0 %v73, 16
    %v75 = vpop.permute.xlu0 %74
    %76 = vrot.lane.b32.xlu0 %v73, 112
    %v77 = vpop.permute.xlu0 %76
    %v78 = vsel %vm49, %v75, %v77
    %v79 = vadd.f32 %v73, %v78
    %v80 = vmul.f32 %v79, 0.03125
    %v81 = vsub.f32 %v27, %v80
    %v82 = vmul.f32 %v81, %v81
    %83 = vrot.lane.b32.xlu0 %v82, 1
    %v84 = vpop.permute.xlu0 %83
    %85 = vrot.lane.b32.xlu0 %v82, 127
    %v86 = vpop.permute.xlu0 %85
    %v87 = vsel %vm33, %v84, %v86
    %v88 = vadd.f32 %v82, %v87
    %89 = vrot.lane.b32.xlu0 %v88, 2
    %v90 = vpop.permute.xlu0 %89
    %91 = vrot.lane.b32.xlu0 %v88, 126
    %v92 = vpop.permute.xlu0 %91
    %v93 = vsel %vm37, %v90, %v92
    %v94 = vadd.f32 %v88, %v93
    %95 = vrot.lane.b32.xlu0 %v94, 4
    %v96 = vpop.permute.xlu0 %95
    %97 = vrot.lane.b32.xlu0 %v94, 124
    %v98 = vpop.permute.xlu0 %97
    %v99 = vsel %vm41, %v96, %v98
    %v100 = vadd.f32 %v94, %v99
    %101 = vrot.lane.b32.xlu0 %v100, 8
    %v102 = vpop.permute.xlu0 %101
    %103 = vrot.lane.b32.xlu0 %v100, 120
    %v104 = vpop.permute.xlu0 %103
    %v105 = vsel %vm45, %v102, %v104
    %v106 = vadd.f32 %v100, %v105
    %107 = vrot.lane.b32.xlu0 %v106, 16
    %v108 = vpop.permute.xlu0 %107
    %109 = vrot.lane.b32.xlu0 %v106, 112
    %v110 = vpop.permute.xlu0 %109
    %v111 = vsel %vm49, %v108, %v110
    %v112 = vadd.f32 %v106, %v111
    %v113 = vmul.f32 %v112, 0.032258064
    %v114 = vrsqrt.pop %v113
    %v115 = vmul.f32 %v113, %v114
    %vm116 = vcmp.eq.f32.partialorder %v113, inf
    %v117 = vsel %vm116, %v113, %v115
    %vm118 = vcmp.eq.f32.partialorder %v113, 0.0
    %v119 = vand.u32 %v113, 2147483648
    %v120 = vsel %vm118, %v119, %v117
    %v121 = vadd.f32 %v120, 1e-06
    %v122 = vrcp.pop %v121
    %v123 = vmul.f32 1.0, %v122
    %v124 = vld [vmem:[%s1] sm:$0x1]
    %v125 = vld [vmem:[%s2] sm:$0x1]
    %v126 = vmul.f32 %v81, %v123
    %v128 = vlaneseq
    %v129 = vshrl.u32 %v128, 7
    %v130 = vsub.s32 0, %v129
    %v131 = vrot.slane %v124, %v130
    %v133 = vmul.f32 %v131, %v126
    %v135 = vlaneseq
    %v136 = vshrl.u32 %v135, 7
    %v137 = vsub.s32 0, %v136
    %v138 = vrot.slane %v125, %v137
    %v140 = vadd.f32 %v133, %v138
    %141 = vst [vmem:[#allocation5] sm:$0xf] %v140
    // Predicated region
    $region18: #{tpu_custom_call.1} parent=1 // pred_check
      _
    $region19: #{tpu_custom_call.1} parent=1 // pred_check_branch
      %143 = sbr.rel (0) target = $region21
    $region20: #{tpu_custom_call.1} parent=1 // pred_region
      %s145 = ssub.s32 64, 64
      %146 = vsyncadd [#allocation4], %s145
      %s148 = sshll.u32 [#allocation5], 4
      %s149 = int_to_ptr.vmem [resolvable:$true] %s148
      %151 = dma.vmem_to_hbm [thread:$0]  %s149, 64, %s3, [#allocation4]
    $region21: #{tpu_custom_call.1} parent=1 // pred_fallthru
      _
    // Predicated region
    $region22: #{tpu_custom_call.1} parent=1 // pred_check
      _
    $region23: #{tpu_custom_call.1} parent=1 // pred_check_branch
      %153 = sbr.rel (0) target = $region25
    $region24: #{tpu_custom_call.1} parent=1 // pred_region
      %154 = dma.done [#allocation4], 64
    $region25: #{tpu_custom_call.1} parent=1 // pred_fallthru
      _
    %155 = vsyncpa [#allocation3], 1
    %156 = vsyncpa [#allocation4], 1

</llo_original>
